<compile_context>
chip_gen: v7x
topology: tpu7x:2x2x1
jax: 0.10.0
libtpu: 0.0.40
codegen_flags: <defaults>
</compile_context>

<pallas_src>
import jax
import jax.numpy as jnp
from jax.experimental import pallas as pl
from jax.experimental.pallas import tpu as pltpu

# Small synthetic config (stands in for config.user_num / item_num /
# embedding_size in the PyTorch module).
NUM_USERS = 64
NUM_ITEMS = 64
EMBED = 128
PADDING_INDEX = 0
LANES = 128


def _mf_score_kernel(users_ref, items_ref, u_row_ref, i_row_ref, out_ref):
    """One grid step = one (user, item) pair.

    users_ref / items_ref : SMEM scalar-prefetch index vectors (consumed by the
                            index_maps; unused in the body).
    u_row_ref / i_row_ref : (1, 1, EMBED) gathered embedding rows in VMEM.
    out_ref               : (1, B_pad) lane-dense score block, resident in VMEM
                            across the whole grid (constant out index_map).
    """
    del users_ref, items_ref
    b = pl.program_id(0)

    @pl.when(b == 0)
    def _():
        out_ref[...] = jnp.zeros_like(out_ref)

    # torch.mul(u, i).sum(-1): VPU multiply + XLU cross-lane reduce.
    score = jnp.sum(u_row_ref[0] * i_row_ref[0], axis=-1, keepdims=True)  # (1, 1)
    lane = jax.lax.broadcasted_iota(jnp.int32, out_ref.shape, dimension=1)
    out_ref[...] = jnp.where(lane == b, score, out_ref[...])


def mf_forward(user_emb, item_emb, users, items):
    """MatrixFactorization.forward(users, items) -> (B,) matching scores."""
    num_users, embed = user_emb.shape
    num_items, _ = item_emb.shape
    b = users.shape[0]
    b_pad = ((b + LANES - 1) // LANES) * LANES

    # (N, D) -> (N, 1, D) view so each gathered block's trailing two dims equal
    # the full array dims (one sublane-row x full 128-lane embedding).
    u_tab = user_emb.reshape(num_users, 1, embed)
    i_tab = item_emb.reshape(num_items, 1, embed)

    grid_spec = pltpu.PrefetchScalarGridSpec(
        num_scalar_prefetch=2,
        grid=(b,),
        in_specs=[
            # Gather row users[i] / items[i] straight from the HBM tables.
            pl.BlockSpec((1, 1, embed), lambda i, u_idx, i_idx: (u_idx[i], 0, 0)),
            pl.BlockSpec((1, 1, embed), lambda i, u_idx, i_idx: (i_idx[i], 0, 0)),
        ],
        out_specs=pl.BlockSpec((1, b_pad), lambda i, u_idx, i_idx: (0, 0)),
    )

    scores = pl.pallas_call(
        _mf_score_kernel,
        out_shape=jax.ShapeDtypeStruct((1, b_pad), jnp.float32),
        grid_spec=grid_spec,
        compiler_params=pltpu.CompilerParams(
            dimension_semantics=("arbitrary",)),  # resident output accumulator
    )(users, items, u_tab, i_tab)

    return scores[0, :b]


def reference_forward(user_emb, item_emb, users, items):
    return jnp.sum(jnp.take(user_emb, users, axis=0) *
                   jnp.take(item_emb, items, axis=0), axis=-1)


if __name__ == "__main__":
    key = jax.random.PRNGKey(0)
    k_u, k_i, k_qu, k_qi = jax.random.split(key, 4)

    # nn.Embedding default init ~ N(0, 1); padding_idx=0 row is zeroed.
    user_emb = jax.random.normal(k_u, (NUM_USERS, EMBED), jnp.float32)
    item_emb = jax.random.normal(k_i, (NUM_ITEMS, EMBED), jnp.float32)
    user_emb = user_emb.at[PADDING_INDEX].set(0.0)
    item_emb = item_emb.at[PADDING_INDEX].set(0.0)
    # TODO(synk): padding_idx also zeroes that row's gradient in torch
    # (training-only); forward lookup semantics are unchanged.

    B = 8
    users = jax.random.randint(k_qu, (B,), 0, NUM_USERS, dtype=jnp.int32)
    items = jax.random.randint(k_qi, (B,), 0, NUM_ITEMS, dtype=jnp.int32)

    matching = jax.jit(mf_forward)(user_emb, item_emb, users, items)
    matching = jax.block_until_ready(matching)

    ref = reference_forward(user_emb, item_emb, users, items)
    assert matching.shape == (B,)
    assert jnp.allclose(matching, ref, atol=1e-5, rtol=1e-5)
    print("KERNEL_OK")
</pallas_src>

<mosaic_0001>
module attributes {stable_mosaic.version = 11 : i64} {
  func.func @_mf_score_kernel(%arg0: i32, %arg1: memref<8xi32, #tpu.memory_space<smem>>, %arg2: memref<8xi32, #tpu.memory_space<smem>>, %arg3: memref<1x1x128xf32, #tpu.memory_space<vmem>>, %arg4: memref<1x1x128xf32, #tpu.memory_space<vmem>>, %arg5: memref<1x128xf32, #tpu.memory_space<vmem>>) attributes {dimension_semantics = [#tpu.dimension_semantics<arbitrary>], iteration_bounds = array<i64: 8>, scalar_prefetch = 2 : i64, scratch_operands = 0 : i64, tpu.core_type = #tpu.core_type<tc>, window_params = [{transform_indices = @transform_0, window_bounds = array<i64: 1, 1, 128>}, {transform_indices = @transform_1, window_bounds = array<i64: 1, 1, 128>}, {pipeline_mode = #tpu.pipeline_mode<synchronous>, transform_indices = @transform_2, window_bounds = array<i64: 1, 128>}]} {
    %c0_i32 = arith.constant 0 : i32
    %0 = arith.cmpi eq, %arg0, %c0_i32 : i32
    %1 = arith.extui %0 : i1 to i32
    %c0_i32_0 = arith.constant 0 : i32
    %2 = arith.cmpi ne, %1, %c0_i32_0 : i32
    scf.if %2 {
      %cst_10 = arith.constant 0.000000e+00 : f32
      %18 = vector.broadcast %cst_10 : f32 to vector<1x128xf32>
      %c0_11 = arith.constant 0 : index
      %c0_12 = arith.constant 0 : index
      %19 = vector.load %arg5[%c0_11, %c0_12] : memref<1x128xf32, #tpu.memory_space<vmem>>, vector<1x128xf32>
      tpu.vector_store %arg5[%c0_11, %c0_12], %18 {strides = array<i32>} : memref<1x128xf32, #tpu.memory_space<vmem>>, vector<1x128xf32>,
    } else {
    }
    %c0 = arith.constant 0 : index
    %c0_1 = arith.constant 0 : index
    %c0_2 = arith.constant 0 : index
    %3 = vector.load %arg3[%c0, %c0_1, %c0_2] : memref<1x1x128xf32, #tpu.memory_space<vmem>>, vector<1x1x128xf32>
    %4 = vector.shape_cast %3 : vector<1x1x128xf32> to vector<1x128xf32>
    %c0_3 = arith.constant 0 : index
    %c0_4 = arith.constant 0 : index
    %c0_5 = arith.constant 0 : index
    %5 = vector.load %arg4[%c0_3, %c0_4, %c0_5] : memref<1x1x128xf32, #tpu.memory_space<vmem>>, vector<1x1x128xf32>
    %6 = vector.shape_cast %5 : vector<1x1x128xf32> to vector<1x128xf32>
    %7 = arith.mulf %4, %6 : vector<1x128xf32>
    %cst = arith.constant dense<0.000000e+00> : vector<1xf32>
    %8 = vector.multi_reduction <add>, %7, %cst [1] : vector<1x128xf32> to vector<1xf32>
    %9 = vector.shape_cast %8 : vector<1xf32> to vector<1x1xf32>
    %10 = tpu.iota {dimensions = array<i32: 1>} : vector<1x128xi32>
    %11 = vector.broadcast %arg0 : i32 to vector<1x128xi32>
    %12 = arith.cmpi eq, %10, %11 : vector<1x128xi32>
    %c0_6 = arith.constant 0 : index
    %c0_7 = arith.constant 0 : index
    %13 = vector.load %arg5[%c0_6, %c0_7] : memref<1x128xf32, #tpu.memory_space<vmem>>, vector<1x128xf32>
    %14 = vector.shape_cast %9 : vector<1x1xf32> to vector<1x1xf32>
    %15 = vector.broadcast %14 : vector<1x1xf32> to vector<1x128xf32>
    %16 = arith.select %12, %15, %13 : vector<1x128xi1>, vector<1x128xf32>
    %c0_8 = arith.constant 0 : index
    %c0_9 = arith.constant 0 : index
    %17 = vector.load %arg5[%c0_8, %c0_9] : memref<1x128xf32, #tpu.memory_space<vmem>>, vector<1x128xf32>
    tpu.vector_store %arg5[%c0_8, %c0_9], %16 {strides = array<i32>} : memref<1x128xf32, #tpu.memory_space<vmem>>, vector<1x128xf32>,
    return
  }
  func.func @transform_0(%arg0: i32, %arg1: memref<8xi32, #tpu.memory_space<smem>>, %arg2: memref<8xi32, #tpu.memory_space<smem>>) -> (i32, i32, i32) {
    %0 = arith.index_cast %arg0 : i32 to index
    %1 = memref.load %arg1[%0] : memref<8xi32, #tpu.memory_space<smem>>
    %c0_i32 = arith.constant 0 : i32
    %c0_i32_0 = arith.constant 0 : i32
    %c0_i32_1 = arith.constant 0 : i32
    return %1, %c0_i32, %c0_i32_0 : i32, i32, i32
  }
  func.func @transform_1(%arg0: i32, %arg1: memref<8xi32, #tpu.memory_space<smem>>, %arg2: memref<8xi32, #tpu.memory_space<smem>>) -> (i32, i32, i32) {
    %0 = arith.index_cast %arg0 : i32 to index
    %1 = memref.load %arg2[%0] : memref<8xi32, #tpu.memory_space<smem>>
    %c0_i32 = arith.constant 0 : i32
    %c0_i32_0 = arith.constant 0 : i32
    %c0_i32_1 = arith.constant 0 : i32
    return %1, %c0_i32, %c0_i32_0 : i32, i32, i32
  }
  func.func @transform_2(%arg0: i32, %arg1: memref<8xi32, #tpu.memory_space<smem>>, %arg2: memref<8xi32, #tpu.memory_space<smem>>) -> (i32, i32) {
    %c0_i32 = arith.constant 0 : i32
    %c0_i32_0 = arith.constant 0 : i32
    %c0_i32_1 = arith.constant 0 : i32
    return %c0_i32, %c0_i32_0 : i32, i32
  }
}

</mosaic_0001>

<llo_original>
// kernel: mf_forward.1
$region0: #{mf_forward.1}
  #allocation0 [shape = 'u32[]', space=smem, size = 0x4, offset = 0x4, fixed_abs, tag = 'smem constant byte address 0x4 - core index']
  #allocation1 [shape = 'u32[144,128]{1,0:T(1,128)}', space=vmem, size = 0x12000, scoped, tag = 'internal scratch']
  #allocation2 [shape = 's32[1]{0}', space=sflag, size = 0x4, scoped, tag = 'scoped memory for mf_forward.1']
  #allocation3 [shape = 'u8[512]{0}', space=smem, size = 0x200, scoped, tag = 'prefetched SMEM operand 0']
  #allocation4 [shape = 'u8[512]{0}', space=smem, size = 0x200, scoped, tag = 'prefetched SMEM operand 1']
  %s0 = inlined_call_operand.vmem [shape: s32[8], index: 0, kind: input, shape index: {}]
  %s1 = inlined_call_operand.vmem [shape: s32[8], index: 1, kind: input, shape index: {}]
  %s2 = inlined_call_operand.hbm [shape: f32[64,1,128], index: 2, kind: input, shape index: {}]
  %s3 = inlined_call_operand.hbm [shape: f32[64,1,128], index: 3, kind: input, shape index: {}]
  %s4 = inlined_call_operand.vmem [shape: f32[1,128], index: 4, kind: output, shape index: {}]
  %s5 = sld [smem:[#allocation0]]
  $region53: #{mf_forward.1} parent=0
    _
  %s7 = ssub.s32 1, %s5
  %s8 = scalar_select 0, %s7, %s5
  %s9 = sshll.u32 %s0, 4
  %s10 = int_to_ptr.vmem [resolvable:$true] %s9
  %12 = dma.vmem_to_smem %s10, 16, [#allocation3], [#allocation2]
  %s13 = sshll.u32 %s1, 4
  %s14 = int_to_ptr.vmem [resolvable:$true] %s13
  %16 = dma.vmem_to_smem %s14, 16, [#allocation4], [#allocation2]
  %17 = dma.done [#allocation2], 32
  %18 = sfence
  $region1: #{mf_forward.1} parent=0
    #allocation5 [shape = 'u8[1024]{0}', space=vmem, size = 0x400, scoped, tag = 'input window, operand 2']
    #allocation6 [shape = 's32[2]{0}', space=sflag, size = 0x8, scoped, tag = 'scoped memory for mf_forward.1']
    #allocation7 [shape = 'u8[1024]{0}', space=vmem, size = 0x400, scoped, tag = 'input window, operand 3']
    #allocation8 [shape = 's32[2]{0}', space=sflag, size = 0x8, scoped, tag = 'scoped memory for mf_forward.1']
    %19 = vsyncpa [#allocation6], 0
    %s20 = scalar_lea.sflag [#allocation6], 1
    %21 = vsyncpa %s20, 0
    %22 = vsyncpa [#allocation8], 0
    %s23 = scalar_lea.sflag [#allocation8], 1
    %24 = vsyncpa %s23, 0
    loop: start=0, step=1, limit=10
    $region2: #{mf_forward.1} parent=1 // loop_pre_header
      _
    $region3: #{mf_forward.1} parent=1 // loop_header
      %s26 = sphi 0, %s30
      %p27 = scmp.ge.s32.totalorder %s26, 10
      %s38 = sphi 0, %s40
      %s41 = sphi 0, %s38
      %s42 = sphi 0, %s41
      %s58 = sphi 0, %s42
      %s66 = sphi 0, %s68
      %s69 = sphi 0, %s66
      %s70 = sphi 0, %s69
      %s86 = sphi 0, %s70
      %s90 = sphi 0, %s90
      %s92 = sphi 0, %s90
      %s93 = sphi 0, %s92
      %s107 = sphi 0, %s93
    $region4: #{mf_forward.1} parent=1 // loop_header_branch
      %29 = sbr.rel (%p27) target = $region8
    $region5: #{mf_forward.1} parent=1 // loop_body
      %s31 = ssub.s32 %s26, 1
      %s32 = ssub.s32 %s26, 2
      %s33 = sadd.s32 %s26, 1
      %s34 = sld [smem:[#allocation3 + %s26]]
      %s35 = sld [smem:[#allocation3 + %s33]]
      %s36 = ssub.s32 %s34, %s35
      %p37 = scmp.eq.s32.totalorder %s36, 0
      %s39 = sadd.s32 %s38, 1
      %s40 = scalar_select %p37, %s38, %s39
      %p43 = pneg %p37
      %p44 = scmp.eq.s32.totalorder %s26, 7
      %p45 = por %p43, %p44
      %p46 = scmp.ne.s32.totalorder %s38, %s41
      %p47 = scmp.eq.s32.totalorder %s26, 0
      %p48 = por %p46, %p47
      %p49 = scmp.ne.s32.totalorder %s38, %s41
      %p50 = scmp.eq.s32.totalorder %s31, 7
      %p51 = por %p49, %p50
      %p52 = scmp.ne.s32.totalorder %s41, %s42
      %p53 = scmp.eq.s32.totalorder %s31, 0
      %p54 = por %p52, %p53
      %p55 = scmp.ne.s32.totalorder %s41, %s42
      %p56 = scmp.eq.s32.totalorder %s32, 7
      %p57 = por %p55, %p56
      %p59 = scmp.ne.s32.totalorder %s42, %s58
      %p60 = scmp.eq.s32.totalorder %s32, 0
      %p61 = por %p59, %p60
      %s62 = sld [smem:[#allocation4 + %s26]]
      %s63 = sld [smem:[#allocation4 + %s33]]
      %s64 = ssub.s32 %s62, %s63
      %p65 = scmp.eq.s32.totalorder %s64, 0
      %s67 = sadd.s32 %s66, 1
      %s68 = scalar_select %p65, %s66, %s67
      %p71 = pneg %p65
      %p72 = scmp.eq.s32.totalorder %s26, 7
      %p73 = por %p71, %p72
      %p74 = scmp.ne.s32.totalorder %s66, %s69
      %p75 = scmp.eq.s32.totalorder %s26, 0
      %p76 = por %p74, %p75
      %p77 = scmp.ne.s32.totalorder %s66, %s69
      %p78 = scmp.eq.s32.totalorder %s31, 7
      %p79 = por %p77, %p78
      %p80 = scmp.ne.s32.totalorder %s69, %s70
      %p81 = scmp.eq.s32.totalorder %s31, 0
      %p82 = por %p80, %p81
      %p83 = scmp.ne.s32.totalorder %s69, %s70
      %p84 = scmp.eq.s32.totalorder %s32, 7
      %p85 = por %p83, %p84
      %p87 = scmp.ne.s32.totalorder %s70, %s86
      %p88 = scmp.eq.s32.totalorder %s32, 0
      %p89 = por %p87, %p88
      %s91 = sadd.s32 %s90, 1
      %p94 = scmp.eq.s32.totalorder %s26, 7
      %p95 = scmp.ne.s32.totalorder %s90, %s92
      %p96 = scmp.eq.s32.totalorder %s26, 0
      %p97 = por %p95, %p96
      %p98 = scmp.ne.s32.totalorder %s90, %s92
      %p99 = scmp.eq.s32.totalorder %s31, 7
      %p100 = por %p98, %p99
      %p101 = scmp.ne.s32.totalorder %s92, %s93
      %p102 = scmp.eq.s32.totalorder %s31, 0
      %p103 = por %p101, %p102
      %p104 = scmp.ne.s32.totalorder %s92, %s93
      %p105 = scmp.eq.s32.totalorder %s32, 7
      %p106 = por %p104, %p105
      %p108 = scmp.ne.s32.totalorder %s93, %s107
      %p109 = scmp.eq.s32.totalorder %s32, 0
      %p110 = por %p108, %p109
      %p111 = scmp.le.s32.totalorder 1, %s26
      %p112 = scmp.lt.s32.totalorder %s26, 9
      %p113 = pnand %p111, %p112
      %p114 = pneg %p113
      // Predicated region
      $region9: #{mf_forward.1} parent=5 // pred_check
        _
      $region10: #{mf_forward.1} parent=5 // pred_check_branch
        %116 = sbr.rel (%p113) target = $region12
      $region11: #{mf_forward.1} parent=5 // pred_region
        %s117 = ssub.s32 %s26, 1
      $region12: #{mf_forward.1} parent=5 // pred_fallthru
        _
      %p118 = scmp.lt.s32.totalorder %s26, 8
      // Predicated region
      $region13: #{mf_forward.1} parent=5 // pred_check
        %p119 = pneg %p118
      $region14: #{mf_forward.1} parent=5 // pred_check_branch
        %121 = sbr.rel (%p119) target = $region16
      $region15: #{mf_forward.1} parent=5 // pred_region
        // Predicated region
        $region17: #{mf_forward.1} parent=15 // pred_check
          %p122 = pneg %p48
        $region18: #{mf_forward.1} parent=15 // pred_check_branch
          %124 = sbr.rel (%p122) target = $region20
        $region19: #{mf_forward.1} parent=15 // pred_region
          %s125 = sand.u32 %s38, 1
          %s126 = scalar_lea.sflag [#allocation6], %s125
          %s127 = sand.u32 %s38, 1
          %s128 = scalar_lea.vmem [#allocation5], %s127
          %s129 = sld [smem:[#allocation3 + %s26]]
          %s131 = ssub.s32 16, 16
          %132 = vsyncadd %s126, %s131
          %s133 = smul.addr %s129, 16
          %s134 = scalar_lea.hbm %s2, %s133
          %s136 = sshll.u32 %s128, 4
          %s137 = int_to_ptr.vmem [resolvable:$true] %s136
          %139 = dma.hbm_to_vmem [thread:$0]  %s134, 16, %s137, %s126
        $region20: #{mf_forward.1} parent=15 // pred_fallthru
          _
        // Predicated region
        $region21: #{mf_forward.1} parent=15 // pred_check
          %p140 = pneg %p76
        $region22: #{mf_forward.1} parent=15 // pred_check_branch
          %142 = sbr.rel (%p140) target = $region24
        $region23: #{mf_forward.1} parent=15 // pred_region
          %s143 = sand.u32 %s66, 1
          %s144 = scalar_lea.sflag [#allocation8], %s143
          %s145 = sand.u32 %s66, 1
          %s146 = scalar_lea.vmem [#allocation7], %s145
          %s147 = sld [smem:[#allocation4 + %s26]]
          %s149 = ssub.s32 16, 16
          %150 = vsyncadd %s144, %s149
          %s151 = smul.addr %s147, 16
          %s152 = scalar_lea.hbm %s3, %s151
          %s154 = sshll.u32 %s146, 4
          %s155 = int_to_ptr.vmem [resolvable:$true] %s154
          %157 = dma.hbm_to_vmem [thread:$0]  %s152, 16, %s155, %s144
        $region24: #{mf_forward.1} parent=15 // pred_fallthru
          _
      $region16: #{mf_forward.1} parent=5 // pred_fallthru
        _
      %p158 = scmp.le.s32.totalorder 1, %s26
      %p159 = scmp.lt.s32.totalorder %s26, 9
      %p160 = pnand %p158, %p159
      %p161 = pneg %p160
      // Predicated region
      $region25: #{mf_forward.1} parent=5 // pred_check
        _
      $region26: #{mf_forward.1} parent=5 // pred_check_branch
        %163 = sbr.rel (%p160) target = $region28
      $region27: #{mf_forward.1} parent=5 // pred_region
        %s164 = ssub.s32 %s26, 1
        %s165 = sand.u32 %s41, 1
        %s166 = scalar_lea.sflag [#allocation6], %s165
        %s167 = sand.u32 %s41, 1
        %s168 = scalar_lea.vmem [#allocation5], %s167
        // Predicated region
        $region29: #{mf_forward.1} parent=27 // pred_check
          %p169 = pneg %p54
        $region30: #{mf_forward.1} parent=27 // pred_check_branch
          %171 = sbr.rel (%p169) target = $region32
        $region31: #{mf_forward.1} parent=27 // pred_region
          %172 = dma.done %s166, 16
        $region32: #{mf_forward.1} parent=27 // pred_fallthru
          _
        %s173 = sand.u32 %s69, 1
        %s174 = scalar_lea.sflag [#allocation8], %s173
        %s175 = sand.u32 %s69, 1
        %s176 = scalar_lea.vmem [#allocation7], %s175
        // Predicated region
        $region33: #{mf_forward.1} parent=27 // pred_check
          %p177 = pneg %p82
        $region34: #{mf_forward.1} parent=27 // pred_check_branch
          %179 = sbr.rel (%p177) target = $region36
        $region35: #{mf_forward.1} parent=27 // pred_region
          %180 = dma.done %s174, 16
        $region36: #{mf_forward.1} parent=27 // pred_fallthru
          _
        %s181 = sand.u32 %s41, 1
        %s182 = scalar_lea.sflag [#allocation6], %s181
        %s183 = sand.u32 %s41, 1
        %s184 = scalar_lea.vmem [#allocation5], %s183
        %p185 = pneg %p54
        %p186 = pneg %p51
        %s187 = sand.u32 %s69, 1
        %s188 = scalar_lea.sflag [#allocation8], %s187
        %s189 = sand.u32 %s69, 1
        %s190 = scalar_lea.vmem [#allocation7], %s189
        %p191 = pneg %p82
        %p192 = pneg %p79
        %p193 = pneg %p103
        %p194 = pneg %p100
        %s195 = sld [smem:[#allocation3 + %s31]]
        %s196 = sld [smem:[#allocation4 + %s31]]
        %p197 = scmp.eq.s32.totalorder %s31, 0
        // Predicated region
        $region37: #{mf_forward.1} parent=27 // pred_check
          %p198 = pneg %p197
        $region38: #{mf_forward.1} parent=27 // pred_check_branch
          %200 = sbr.rel (%p198) target = $region40
        $region39: #{mf_forward.1} parent=27 // pred_region
          %201 = vst [vmem:[%s4] sm:$0x1] 0.0
        $region40: #{mf_forward.1} parent=27 // pred_fallthru
          _
        %v202 = vld [vmem:[%s168] sm:$0x1]
        %v203 = vld [vmem:[%s176] sm:$0x1]
        %v204 = vmul.f32 %v202, %v203
        %vm205 = vcmask 1040384
        %v206 = vsel %vm205, %v204, 0.0
        %207 = vadd.xlane.f32.xlu0 %v206
        %v208 = vpop.xlane.xlu0 %207
        %v209 = vlaneseq
        %v210 = vand.u32 %v209, 127
        %v211 = vstv %s31
        %vm212 = vcmp.eq.s32.totalorder %v210, %v211
        %v213 = vld [vmem:[%s4] sm:$0x1]
        %v214 = vsel %vm212, %v208, %v213
        %215 = vst [vmem:[%s4] sm:$0x1] %v214
        // Predicated region
        $region41: #{mf_forward.1} parent=27 // pred_check
          %p216 = pneg %p100
        $region42: #{mf_forward.1} parent=27 // pred_check_branch
          %218 = sbr.rel (%p216) target = $region44
        $region43: #{mf_forward.1} parent=27 // pred_region
          _
        $region44: #{mf_forward.1} parent=27 // pred_fallthru
          _
        // Predicated region
        $region45: #{mf_forward.1} parent=27 // pred_check
          %p219 = pneg %p100
        $region46: #{mf_forward.1} parent=27 // pred_check_branch
          %221 = sbr.rel (%p219) target = $region48
        $region47: #{mf_forward.1} parent=27 // pred_region
          _
        $region48: #{mf_forward.1} parent=27 // pred_fallthru
          _
      $region28: #{mf_forward.1} parent=5 // pred_fallthru
        _
      %p222 = scmp.le.s32.totalorder 2, %s26
      // Predicated region
      $region49: #{mf_forward.1} parent=5 // pred_check
        %p223 = pneg %p222
      $region50: #{mf_forward.1} parent=5 // pred_check_branch
        %225 = sbr.rel (%p223) target = $region52
      $region51: #{mf_forward.1} parent=5 // pred_region
        %s226 = ssub.s32 %s26, 2
      $region52: #{mf_forward.1} parent=5 // pred_fallthru
        _
    $region6: #{mf_forward.1} parent=1 // loop_footer
      %s30 = sadd.s32 1, %s26
    $region7: #{mf_forward.1} parent=1 // loop_footer_branch
      %25 = sbr.rel target = $region3
    $region8: #{mf_forward.1} parent=1 // loop_exit
      _
    %227 = vsyncpa [#allocation6], 1
    %s228 = scalar_lea.sflag [#allocation6], 1
    %229 = vsyncpa %s228, 1
    %230 = vsyncpa [#allocation8], 1
    %s231 = scalar_lea.sflag [#allocation8], 1
    %232 = vsyncpa %s231, 1

</llo_original>
